<compile_context>
chip_gen: v5e
topology: v5e:2x2
jax: 0.10.0
libtpu: 0.0.40
codegen_flags: <defaults>
</compile_context>

<pallas_src>
import functools
import math

import jax
import jax.numpy as jnp
from jax import lax
from jax.experimental import pallas as pl
from jax.experimental.pallas import tpu as pltpu


# ---------------------------------------------------------------------------
# small helpers
# ---------------------------------------------------------------------------

def _round_up(n, m):
    return (n + m - 1) // m * m


def _row_align(*dtypes):
    # sublane packing: f32 -> 8 rows, bf16 -> 16, int8/fp8 -> 32
    return max(8 * (4 // jnp.dtype(d).itemsize) for d in dtypes)


def _pick_block(total, unit, target):
    """Largest multiple of `unit` that divides `total` and is <= target.
    Falls back to the full extent when `total` is not a multiple of `unit`."""
    if total % unit != 0:
        return total
    best = unit
    d = unit
    limit = min(total, max(target, unit))
    while d <= limit:
        if total % d == 0:
            best = d
        d += unit
    return best


def _vmem_capacity_bytes():
    try:
        cap = getattr(pltpu.get_tpu_info(), "vmem_capacity_bytes", None)
        if cap:
            return int(cap)
    except Exception:
        pass
    return 64 * 1024 * 1024  # conservative default (v7x-sized VMEM)


# ---------------------------------------------------------------------------
# kernels
# ---------------------------------------------------------------------------

def _fused_kernel(x_ref, w_ref, b_ref, o_ref, acc_ref):
    """Single-pass path: the whole vocab sits on lanes of one output tile."""
    k = pl.program_id(1)

    @pl.when(k == 0)
    def _init():
        # Seed the f32 accumulator with the bias (saves a separate add).
        acc_ref[...] = jnp.broadcast_to(
            b_ref[...].astype(jnp.float32), acc_ref.shape)

    # (rows, K) x (V, K) contracted on the last dims -> (rows, V).  Keeping the
    # weight in its embedding layout avoids materializing W^T in HBM.
    acc_ref[...] += lax.dot_general(
        x_ref[...], w_ref[...],
        dimension_numbers=(((1,), (1,)), ((), ())),
        preferred_element_type=jnp.float32)

    @pl.when(k == pl.num_programs(1) - 1)
    def _finalize():
        logits = acc_ref[...]
        m = jnp.max(logits, axis=-1, keepdims=True)                 # XLU reduce
        s = logits - m
        lse = jnp.log(jnp.sum(jnp.exp(s), axis=-1, keepdims=True))  # EUP + XLU
        o_ref[...] = (s - lse).astype(o_ref.dtype)


def _logits_lse_kernel(x_ref, w_ref, b_ref, logits_ref, lse_ref, m_ref, l_ref):
    """Vocab-tiled pass 1: f32 logits per (row, vocab) tile accumulated over K
    directly in the resident output block, plus an online logsumexp."""
    j = pl.program_id(1)
    k = pl.program_id(2)
    nj = pl.num_programs(1)
    nk = pl.num_programs(2)

    @pl.when(jnp.logical_and(j == 0, k == 0))
    def _init_stats():
        m_ref[...] = jnp.full(m_ref.shape, -jnp.inf, m_ref.dtype)
        l_ref[...] = jnp.zeros_like(l_ref)

    @pl.when(k == 0)
    def _init_acc():
        logits_ref[...] = jnp.broadcast_to(
            b_ref[...].astype(jnp.float32), logits_ref.shape)

    logits_ref[...] += lax.dot_general(
        x_ref[...], w_ref[...],
        dimension_numbers=(((1,), (1,)), ((), ())),
        preferred_element_type=jnp.float32)

    @pl.when(k == nk - 1)
    def _update_stats():
        logits = logits_ref[...]
        m_new = jnp.maximum(m_ref[...], jnp.max(logits, axis=-1, keepdims=True))
        l_ref[...] = l_ref[...] * jnp.exp(m_ref[...] - m_new) + jnp.sum(
            jnp.exp(logits - m_new), axis=-1, keepdims=True)
        m_ref[...] = m_new

        @pl.when(j == nj - 1)
        def _write_lse():
            lse_ref[...] = m_ref[...] + jnp.log(l_ref[...])


def _normalize_kernel(logits_ref, lse_ref, o_ref):
    """Pass 2: out = logits - lse (elementwise, lane-dense)."""
    o_ref[...] = (logits_ref[...] - lse_ref[...]).astype(o_ref.dtype)


# ---------------------------------------------------------------------------
# wrapper
# ---------------------------------------------------------------------------

def projection_log_softmax(
    x,
    weight,                      # (vocab, d_model) -- shared embedding layout
    bias,                        # (vocab,)
    *,
    block_rows=None,
    block_k=None,
    block_v=None,
    compute_dtype=jnp.bfloat16,  # matmul operand dtype (f32 accumulation)
):
    *lead, d_model = x.shape
    vocab, d_model_w = weight.shape
    if d_model_w != d_model:
        raise ValueError("weight last dim must match x last dim")
    if bias.shape != (vocab,):
        raise ValueError("bias must have shape (vocab,)")

    out_dtype = x.dtype
    cdtype = jnp.dtype(compute_dtype) if compute_dtype is not None else jnp.dtype(x.dtype)

    x2 = x.reshape(-1, d_model).astype(cdtype)
    w = weight.astype(cdtype)            # stays (vocab, d_model): no W^T pass
    b2 = bias.reshape(1, vocab)
    rows = x2.shape[0]

    vmem_cap = _vmem_capacity_bytes()
    budget = int(0.85 * vmem_cap)        # headroom for Mosaic internal scratch
    big_vmem = vmem_cap >= 96 * 1024 * 1024

    # ---- tile sizes ------------------------------------------------------
    row_align = _row_align(cdtype, out_dtype)
    # Weight-streaming roofline (flops per weight byte): ~240 v5e, ~650 v6e,
    # ~320 v7x.  VMEM capacity is used as the generation proxy.
    target_rows = 512 if big_vmem else 256

    if block_k is None:
        block_k = _pick_block(d_model, 128, 512)
    elif d_model % block_k != 0 or (block_k != d_model and block_k % 128 != 0):
        raise ValueError("block_k must divide d_model and be a multiple of 128")

    if block_v is None:
        block_v = _pick_block(vocab, 128, 2048 if big_vmem else 1024)
    elif vocab % block_v != 0 or (block_v != vocab and block_v % 128 != 0):
        raise ValueError("block_v must divide vocab and be a multiple of 128")
    # TODO(synk): vocab sizes that are not a multiple of 128 fall back to a
    # single full-vocab tile; pad the vocab axis (bias=-inf) to tile those too.

    n_vb = vocab // block_v
    use_fused = n_vb == 1

    if block_rows is None:
        block_rows = target_rows
    block_rows = min(block_rows, _round_up(rows, row_align))
    block_rows = max(row_align, _round_up(block_rows, row_align))

    cbytes = jnp.dtype(cdtype).itemsize
    obytes = jnp.dtype(out_dtype).itemsize
    bbytes = jnp.dtype(bias.dtype).itemsize

    def footprint(br):
        if use_fused:
            return (2 * br * block_k * cbytes          # x tile (dbl-buffered)
                    + 2 * vocab * block_k * cbytes     # weight tile
                    + 2 * vocab * bbytes               # bias
                    + 2 * br * vocab * obytes          # output tile
                    + br * vocab * 4)                  # f32 accumulator scratch
        return (2 * br * block_k * cbytes              # x tile
                + 2 * block_v * block_k * cbytes       # weight tile
                + 2 * block_v * bbytes                 # bias
                + 2 * br * block_v * 4                 # resident f32 logits out
                + 2 * br * 4                           # lse out
                + 2 * br * 4)                          # m/l scratch

    while footprint(block_rows) > budget and block_rows > row_align:
        block_rows = max(row_align, _round_up(block_rows // 2, row_align))

    rows_padded = _round_up(rows, block_rows)
    # v7x megacore: give the "parallel" row axis >= 2 blocks when there is
    # enough work for both TensorCores (each half stays roofline-sized).
    if rows_padded // block_rows == 1 and block_rows >= 512:
        block_rows = max(row_align, _round_up(block_rows // 2, row_align))
        rows_padded = _round_up(rows, block_rows)

    if rows_padded != rows:
        x2 = jnp.pad(x2, ((0, rows_padded - rows), (0, 0)))

    n_rb = rows_padded // block_rows
    n_kb = d_model // block_k

    vmem_limit = int(min(budget, max(16 * 1024 * 1024,
                                     int(footprint(block_rows) * 1.4))))

    cost = pl.CostEstimate(
        flops=2 * rows_padded * d_model * vocab,
        transcendentals=rows_padded * vocab,
        bytes_accessed=(rows_padded * d_model * cbytes
                        + n_rb * vocab * d_model * cbytes
                        + rows_padded * vocab * obytes),
    )

    if use_fused:
        out2 = pl.pallas_call(
            _fused_kernel,
            out_shape=jax.ShapeDtypeStruct((rows_padded, vocab), out_dtype),
            grid_spec=pltpu.PrefetchScalarGridSpec(
                num_scalar_prefetch=0,
                grid=(n_rb, n_kb),
                in_specs=[
                    pl.BlockSpec((block_rows, block_k), lambda i, k: (i, k)),
                    pl.BlockSpec((vocab, block_k), lambda i, k: (0, k)),
                    pl.BlockSpec((1, vocab), lambda i, k: (0, 0)),
                ],
                out_specs=pl.BlockSpec((block_rows, vocab), lambda i, k: (i, 0)),
                scratch_shapes=[pltpu.VMEM((block_rows, vocab), jnp.float32)],
            ),
            compiler_params=pltpu.CompilerParams(
                dimension_semantics=("parallel", "arbitrary"),
                vmem_limit_bytes=vmem_limit),
            cost_estimate=cost,
        )(x2, w, b2)
    else:
        logits, lse = pl.pallas_call(
            _logits_lse_kernel,
            out_shape=(
                jax.ShapeDtypeStruct((rows_padded, vocab), jnp.float32),
                jax.ShapeDtypeStruct((rows_padded, 1), jnp.float32),
            ),
            grid_spec=pltpu.PrefetchScalarGridSpec(
                num_scalar_prefetch=0,
                grid=(n_rb, n_vb, n_kb),
                in_specs=[
                    pl.BlockSpec((block_rows, block_k), lambda i, j, k: (i, k)),
                    pl.BlockSpec((block_v, block_k), lambda i, j, k: (j, k)),
                    pl.BlockSpec((1, block_v), lambda i, j, k: (0, j)),
                ],
                out_specs=[
                    pl.BlockSpec((block_rows, block_v), lambda i, j, k: (i, j)),
                    pl.BlockSpec((block_rows, 1), lambda i, j, k: (i, 0)),
                ],
                scratch_shapes=[pltpu.VMEM((block_rows, 1), jnp.float32),
                                pltpu.VMEM((block_rows, 1), jnp.float32)],
            ),
            compiler_params=pltpu.CompilerParams(
                dimension_semantics=("parallel", "arbitrary", "arbitrary"),
                vmem_limit_bytes=vmem_limit),
            cost_estimate=cost,
        )(x2, w, b2)

        aliases = {0: 0} if jnp.dtype(out_dtype) == jnp.float32 else {}
        out2 = pl.pallas_call(
            _normalize_kernel,
            out_shape=jax.ShapeDtypeStruct((rows_padded, vocab), out_dtype),
            grid_spec=pltpu.PrefetchScalarGridSpec(
                num_scalar_prefetch=0,
                grid=(n_rb, n_vb),
                in_specs=[
                    pl.BlockSpec((block_rows, block_v), lambda i, j: (i, j)),
                    pl.BlockSpec((block_rows, 1), lambda i, j: (i, 0)),
                ],
                out_specs=pl.BlockSpec((block_rows, block_v), lambda i, j: (i, j)),
            ),
            compiler_params=pltpu.CompilerParams(
                dimension_semantics=("parallel", "parallel"),
                vmem_limit_bytes=vmem_limit),
            input_output_aliases=aliases,
        )(logits, lse)

    if rows_padded != rows:
        out2 = out2[:rows]
    return out2.reshape(*lead, vocab)


# ---------------------------------------------------------------------------
# reference & test
# ---------------------------------------------------------------------------

def _reference(x, weight, bias, compute_dtype=jnp.bfloat16):
    xc = x.astype(compute_dtype).astype(jnp.float32)
    wc = weight.astype(compute_dtype).astype(jnp.float32)
    logits = (jnp.dot(xc, wc.T, precision=lax.Precision.HIGHEST)
              + bias.astype(jnp.float32))
    return jax.nn.log_softmax(logits, axis=-1).astype(x.dtype)


if __name__ == "__main__":
    key = jax.random.PRNGKey(0)
    kx, kw, kb, kx2, kw2, kb2 = jax.random.split(key, 6)

    # --- case 1: tiny shapes, full-vocab fused path -----------------------
    batch, seq, d_model, vocab = 2, 8, 32, 64
    x = jax.random.normal(kx, (batch, seq, d_model), dtype=jnp.float32)
    bound = 1.0 / math.sqrt(d_model)
    weight = jax.random.uniform(kw, (vocab, d_model), jnp.float32, -bound, bound)
    bias = jax.random.uniform(kb, (vocab,), jnp.float32, -bound, bound)

    fwd = jax.jit(projection_log_softmax)
    out = jax.block_until_ready(fwd(x, weight, bias))
    ref = _reference(x, weight, bias)
    assert out.shape == (batch, seq, vocab)
    assert jnp.allclose(out, ref, atol=2e-3, rtol=2e-3), "mismatch vs reference (fused)"
    assert jnp.allclose(jnp.sum(jnp.exp(out), axis=-1), 1.0, atol=1e-3)

    # --- case 2: forces the vocab-tiled online-logsumexp two-pass path ----
    d_model2, vocab2 = 128, 256
    x2 = jax.random.normal(kx2, (batch, seq, d_model2), dtype=jnp.float32)
    bound2 = 1.0 / math.sqrt(d_model2)
    weight2 = jax.random.uniform(kw2, (vocab2, d_model2), jnp.float32, -bound2, bound2)
    bias2 = jax.random.uniform(kb2, (vocab2,), jnp.float32, -bound2, bound2)

    fwd_tiled = jax.jit(functools.partial(projection_log_softmax, block_v=128))
    out2 = jax.block_until_ready(fwd_tiled(x2, weight2, bias2))
    ref2 = _reference(x2, weight2, bias2)
    assert out2.shape == (batch, seq, vocab2)
    assert jnp.allclose(out2, ref2, atol=2e-3, rtol=2e-3), "mismatch vs reference (tiled)"
    assert jnp.allclose(jnp.sum(jnp.exp(out2), axis=-1), 1.0, atol=1e-3)

    print("KERNEL_OK")
</pallas_src>

<mosaic_0001>
module attributes {stable_mosaic.version = 11 : i64} {
  func.func @_fused_kernel(%arg0: i32, %arg1: i32, %arg2: memref<16x32xbf16, #tpu.memory_space<vmem>>, %arg3: memref<64x32xbf16, #tpu.memory_space<vmem>>, %arg4: memref<1x64xf32, #tpu.memory_space<vmem>>, %arg5: memref<16x64xf32, #tpu.memory_space<vmem>>, %arg6: memref<16x64xf32, #tpu.memory_space<vmem>>) attributes {dimension_semantics = [#tpu.dimension_semantics<parallel>, #tpu.dimension_semantics<arbitrary>], iteration_bounds = array<i64: 1, 1>, scalar_prefetch = 0 : i64, scratch_operands = 1 : i64, tpu.core_type = #tpu.core_type<tc>, window_params = [{transform_indices = @transform_0, window_bounds = array<i64: 16, 32>}, {transform_indices = @transform_1, window_bounds = array<i64: 64, 32>}, {pipeline_mode = #tpu.pipeline_mode<synchronous>, transform_indices = @transform_2, window_bounds = array<i64: 1, 64>}, {transform_indices = @transform_3, window_bounds = array<i64: 16, 64>}]} {
    %c0_i32 = arith.constant 0 : i32
    %0 = arith.cmpi eq, %arg1, %c0_i32 : i32
    %1 = arith.extui %0 : i1 to i32
    %c0_i32_0 = arith.constant 0 : i32
    %2 = arith.cmpi ne, %1, %c0_i32_0 : i32
    scf.if %2 {
      %c0_10 = arith.constant 0 : index
      %c0_11 = arith.constant 0 : index
      %12 = vector.load %arg4[%c0_10, %c0_11] : memref<1x64xf32, #tpu.memory_space<vmem>>, vector<1x64xf32>
      %13 = vector.shape_cast %12 : vector<1x64xf32> to vector<1x64xf32>
      %14 = vector.broadcast %13 : vector<1x64xf32> to vector<16x64xf32>
      %c0_12 = arith.constant 0 : index
      %c0_13 = arith.constant 0 : index
      %15 = vector.load %arg6[%c0_12, %c0_13] : memref<16x64xf32, #tpu.memory_space<vmem>>, vector<16x64xf32>
      tpu.vector_store %arg6[%c0_12, %c0_13], %14 {strides = array<i32>} : memref<16x64xf32, #tpu.memory_space<vmem>>, vector<16x64xf32>,
    } else {
    }
    %c0 = arith.constant 0 : index
    %c0_1 = arith.constant 0 : index
    %3 = vector.load %arg6[%c0, %c0_1] : memref<16x64xf32, #tpu.memory_space<vmem>>, vector<16x64xf32>
    %c0_2 = arith.constant 0 : index
    %c0_3 = arith.constant 0 : index
    %4 = vector.load %arg2[%c0_2, %c0_3] : memref<16x32xbf16, #tpu.memory_space<vmem>>, vector<16x32xbf16>
    %c0_4 = arith.constant 0 : index
    %c0_5 = arith.constant 0 : index
    %5 = vector.load %arg3[%c0_4, %c0_5] : memref<64x32xbf16, #tpu.memory_space<vmem>>, vector<64x32xbf16>
    %cst = arith.constant dense<0.000000e+00> : vector<16x64xf32>
    %6 = tpu.matmul %4, %5, %cst {dimension_numbers = #tpu.dot_dimension_numbers<[1], [1], [0], [0], [0, 0, 1, 0], [], []>} : vector<16x32xbf16>, vector<64x32xbf16>, vector<16x64xf32> -> vector<16x64xf32>
    %7 = arith.addf %3, %6 : vector<16x64xf32>
    %c0_6 = arith.constant 0 : index
    %c0_7 = arith.constant 0 : index
    %8 = vector.load %arg6[%c0_6, %c0_7] : memref<16x64xf32, #tpu.memory_space<vmem>>, vector<16x64xf32>
    tpu.vector_store %arg6[%c0_6, %c0_7], %7 {strides = array<i32>} : memref<16x64xf32, #tpu.memory_space<vmem>>, vector<16x64xf32>,
    %c0_i32_8 = arith.constant 0 : i32
    %9 = arith.cmpi eq, %arg1, %c0_i32_8 : i32
    %10 = arith.extui %9 : i1 to i32
    %c0_i32_9 = arith.constant 0 : i32
    %11 = arith.cmpi ne, %10, %c0_i32_9 : i32
    scf.if %11 {
      %c0_10 = arith.constant 0 : index
      %c0_11 = arith.constant 0 : index
      %12 = vector.load %arg6[%c0_10, %c0_11] : memref<16x64xf32, #tpu.memory_space<vmem>>, vector<16x64xf32>
      %cst_12 = arith.constant dense<0xFF800000> : vector<16xf32>
      %13 = vector.multi_reduction <maximumf>, %12, %cst_12 [1] : vector<16x64xf32> to vector<16xf32>
      %14 = vector.shape_cast %13 : vector<16xf32> to vector<16x1xf32>
      %15 = vector.broadcast %14 : vector<16x1xf32> to vector<16x64xf32>
      %16 = arith.subf %12, %15 : vector<16x64xf32>
      %17 = math.exp %16 : vector<16x64xf32>
      %cst_13 = arith.constant dense<0.000000e+00> : vector<16xf32>
      %18 = vector.multi_reduction <add>, %17, %cst_13 [1] : vector<16x64xf32> to vector<16xf32>
      %19 = vector.shape_cast %18 : vector<16xf32> to vector<16x1xf32>
      %20 = math.log %19 : vector<16x1xf32>
      %21 = vector.broadcast %20 : vector<16x1xf32> to vector<16x64xf32>
      %22 = arith.subf %16, %21 : vector<16x64xf32>
      %c0_14 = arith.constant 0 : index
      %c0_15 = arith.constant 0 : index
      %23 = vector.load %arg5[%c0_14, %c0_15] : memref<16x64xf32, #tpu.memory_space<vmem>>, vector<16x64xf32>
      tpu.vector_store %arg5[%c0_14, %c0_15], %22 {strides = array<i32>} : memref<16x64xf32, #tpu.memory_space<vmem>>, vector<16x64xf32>,
    } else {
    }
    return
  }
  func.func @transform_0(%arg0: i32, %arg1: i32) -> (i32, i32) {
    %c0_i32 = arith.constant 0 : i32
    return %arg0, %arg1 : i32, i32
  }
  func.func @transform_1(%arg0: i32, %arg1: i32) -> (i32, i32) {
    %c0_i32 = arith.constant 0 : i32
    %c0_i32_0 = arith.constant 0 : i32
    return %c0_i32, %arg1 : i32, i32
  }
  func.func @transform_2(%arg0: i32, %arg1: i32) -> (i32, i32) {
    %c0_i32 = arith.constant 0 : i32
    %c0_i32_0 = arith.constant 0 : i32
    %c0_i32_1 = arith.constant 0 : i32
    return %c0_i32, %c0_i32_0 : i32, i32
  }
  func.func @transform_3(%arg0: i32, %arg1: i32) -> (i32, i32) {
    %c0_i32 = arith.constant 0 : i32
    %c0_i32_0 = arith.constant 0 : i32
    return %arg0, %c0_i32 : i32, i32
  }
}

</mosaic_0001>

<llo_original>
// kernel: projection_log_softmax.1
$region0: #{projection_log_softmax.1}
  #allocation0 [shape = 'u32[]', space=smem, size = 0x4, offset = 0x4, fixed_abs, tag = 'smem constant byte address 0x4 - core index']
  #allocation1 [shape = 'u32[72,128]{1,0:T(1,128)}', space=vmem, size = 0x9000, scoped, tag = 'internal scratch']
  #allocation2 [shape = 'f32[16,64]{1,0:T(8,128)}', space=vmem, size = 0x2000, scoped, tag = 'scratch operand']
  %s0 = inlined_call_operand.vmem [shape: bf16[16,32], index: 0, kind: input, shape index: {}]
  %s1 = inlined_call_operand.vmem [shape: bf16[64,32], index: 1, kind: input, shape index: {}]
  %s2 = inlined_call_operand.vmem [shape: f32[1,64], index: 2, kind: input, shape index: {}]
  %s3 = inlined_call_operand.hbm [shape: f32[16,64], index: 3, kind: output, shape index: {}]
  %s4 = sld [smem:[#allocation0]]
  $region30: #{projection_log_softmax.1} parent=0
    _
  %s6 = ssub.s32 1, %s4
  %s7 = scalar_select 0, %s6, %s4
  $region1: #{projection_log_softmax.1} parent=0
    #allocation3 [shape = 'u8[8192]{0}', space=vmem, size = 0x2000, scoped, tag = 'output window, operand 0, single buffered']
    #allocation4 [shape = 's32[1]{0}', space=sflag, size = 0x4, scoped, tag = 'scoped memory for projection_log_softmax.1']
    %8 = vsyncpa [#allocation4], 0
    // Predicated region
    $region2: #{projection_log_softmax.1} parent=1 // pred_check
      _
    $region3: #{projection_log_softmax.1} parent=1 // pred_check_branch
      %10 = sbr.rel (0) target = $region5
    $region4: #{projection_log_softmax.1} parent=1 // pred_region
      _
    $region5: #{projection_log_softmax.1} parent=1 // pred_fallthru
      _
    // Predicated region
    $region6: #{projection_log_softmax.1} parent=1 // pred_check
      _
    $region7: #{projection_log_softmax.1} parent=1 // pred_check_branch
      %12 = sbr.rel (0) target = $region9
    $region8: #{projection_log_softmax.1} parent=1 // pred_region
      _
    $region9: #{projection_log_softmax.1} parent=1 // pred_fallthru
      _
    // Predicated region
    $region10: #{projection_log_softmax.1} parent=1 // pred_check
      _
    $region11: #{projection_log_softmax.1} parent=1 // pred_check_branch
      %14 = sbr.rel (0) target = $region13
    $region12: #{projection_log_softmax.1} parent=1 // pred_region
      _
    $region13: #{projection_log_softmax.1} parent=1 // pred_fallthru
      _
    %p16 = scmp.eq.s32.totalorder 0, 0
    // Predicated region
    $region14: #{projection_log_softmax.1} parent=1 // pred_check
      %p17 = pneg %p16
    $region15: #{projection_log_softmax.1} parent=1 // pred_check_branch
      %19 = sbr.rel (%p17) target = $region17
    $region16: #{projection_log_softmax.1} parent=1 // pred_region
      %v20 = vld [vmem:[%s2] sm:$0x1]
      %v22 = vperm.slane %v20, 0
      %vm24 = vcmask 523264
      %25 = vst.msk [vmem:[#allocation2] sm:$0xff] %vm24, %v22
      %26 = vst.msk [vmem:[#allocation2 + $0x8] sm:$0xff] %vm24, %v22
    $region17: #{projection_log_softmax.1} parent=1 // pred_fallthru
      _
    %v27 = vld [vmem:[#allocation2] sm:$0xff]
    %v28 = vld [vmem:[#allocation2 + $0x8] sm:$0xff]
    %v29 = vld [vmem:[%s0] sm:$0xf]
    %v30 = vld [vmem:[%s0 + $0x4] sm:$0xf]
    %v31 = vld [vmem:[%s1] sm:$0xf]
    %v32 = vld [vmem:[%s1 + $0x4] sm:$0xf]
    %v33 = vld [vmem:[%s1 + $0x8] sm:$0xf]
    %v34 = vld [vmem:[%s1 + $0xc] sm:$0xf]
    %v35 = vld [vmem:[%s1 + $0x10] sm:$0xf]
    %v36 = vld [vmem:[%s1 + $0x14] sm:$0xf]
    %v37 = vld [vmem:[%s1 + $0x18] sm:$0xf]
    %v38 = vld [vmem:[%s1 + $0x1c] sm:$0xf]
    %v41 = vunpack.c.l.b16 %v29
    %v42 = vunpack.c.l.b16 %v30
    %v43 = vpack.c.b16 %v42, %v41
    %v52 = vunpack.c.l.b16 %v31
    %v53 = vunpack.c.l.b16 %v32
    %v54 = vunpack.c.l.b16 %v33
    %v55 = vunpack.c.l.b16 %v34
    %v56 = vunpack.c.l.b16 %v35
    %v57 = vunpack.c.l.b16 %v36
    %v58 = vunpack.c.l.b16 %v37
    %v59 = vunpack.c.l.b16 %v38
    %v60 = vpack.c.b16 %v53, %v52
    %v61 = vpack.c.b16 %v55, %v54
    %v62 = vpack.c.b16 %v57, %v56
    %v63 = vpack.c.b16 %v59, %v58
    %vm64 = vcmask 261120
    %v66 = vsel %vm64, %v43, 0
    %v69 = vsel %vm64, %v60, 0
    %v72 = vsel %vm64, %v61, 0
    %v75 = vsel %vm64, %v62, 0
    %v78 = vsel %vm64, %v63, 0
    %80 = vmatpush.bf16.xpose.msra.mxu0 0
    %81 = vmatpush.bf16.xpose.msra.mxu0 0
    %82 = vmatpush.bf16.xpose.msra.mxu0 0
    %83 = vmatpush.bf16.xpose.msra.mxu0 0
    %84 = vmatpush.bf16.xpose.msra.mxu0 %v78
    %85 = vmatpush.bf16.xpose.msra.mxu0 %v75
    %86 = vmatpush.bf16.xpose.msra.mxu0 %v72
    %87 = vmatpush.bf16.xpose.msra.mxu0 %v69
    %88 = vmatmul.bf16.gmra.mxu0 %v66
    %v89 = vpop.f32.mrf.mxu0
    %v90 = vadd.f32 0.0, %v89
    %v91 = vpop.f32.mrf.mxu0
    %v92 = vadd.f32 0.0, %v91
    %93 = vdwg.mxu0
    %v94 = vadd.f32 %v27, %v90
    %v95 = vadd.f32 %v28, %v92
    %vm96 = vcmask 523264
    %97 = vst.msk [vmem:[#allocation2] sm:$0xff] %vm96, %v94
    %98 = vst.msk [vmem:[#allocation2 + $0x8] sm:$0xff] %vm96, %v95
    // Predicated region
    $region18: #{projection_log_softmax.1} parent=1 // pred_check
      %p99 = pneg %p16
    $region19: #{projection_log_softmax.1} parent=1 // pred_check_branch
      %101 = sbr.rel (%p99) target = $region21
    $region20: #{projection_log_softmax.1} parent=1 // pred_region
      %v102 = vld [vmem:[#allocation2] sm:$0xff]
      %v103 = vld [vmem:[#allocation2 + $0x8] sm:$0xff]
      %v104 = vsel %vm96, %v102, -inf
      %105 = vmax.xlane.f32.xlu0 %v104
      %v106 = vpop.xlane.xlu0 %105
      %v107 = vsel %vm96, %v103, -inf
      %108 = vmax.xlane.f32.xlu0 %v107
      %v109 = vpop.xlane.xlu0 %108
      %v110 = vsub.f32 %v102, %v106
      %v111 = vsub.f32 %v103, %v109
      %v112 = vmul.f32 %v110, 1.442695
      %v113 = vpow.pop %v112
      %v114 = vmul.f32 %v111, 1.442695
      %v115 = vpow.pop %v114
      %v116 = vsel %vm96, %v113, 0.0
      %117 = vadd.xlane.f32.xlu0 %v116
      %v118 = vpop.xlane.xlu0 %117
      %v119 = vsel %vm96, %v115, 0.0
      %120 = vadd.xlane.f32.xlu0 %v119
      %v121 = vpop.xlane.xlu0 %120
      %v122 = vlog2.pop %v118
      %v123 = vmul.f32 %v122, 0.6931472
      %v124 = vlog2.pop %v121
      %v125 = vmul.f32 %v124, 0.6931472
      %v126 = vsub.f32 %v110, %v123
      %v127 = vsub.f32 %v111, %v125
      %128 = vst.msk [vmem:[#allocation3] sm:$0xff] %vm96, %v126
      %129 = vst.msk [vmem:[#allocation3 + $0x8] sm:$0xff] %vm96, %v127
    $region21: #{projection_log_softmax.1} parent=1 // pred_fallthru
      _
    // Predicated region
    $region22: #{projection_log_softmax.1} parent=1 // pred_check
      _
    $region23: #{projection_log_softmax.1} parent=1 // pred_check_branch
      %131 = sbr.rel (0) target = $region25
    $region24: #{projection_log_softmax.1} parent=1 // pred_region
      %133 = vsyncadd [#allocation4], 0
      %s134 = sshll.u32 [#allocation3], 4
      %s135 = int_to_ptr.vmem [resolvable:$true] %s134
      %s136 = sshll.u32 %s3, 4
      %s137 = int_to_ptr.hbm [resolvable:$true] %s136
      %142 = dma.vmem_to_hbm [thread:$0]  %s135, 256, %s137, [#allocation4], 128, 128, 8
    $region25: #{projection_log_softmax.1} parent=1 // pred_fallthru
      _
    // Predicated region
    $region26: #{projection_log_softmax.1} parent=1 // pred_check
      _
    $region27: #{projection_log_softmax.1} parent=1 // pred_check_branch
      %144 = sbr.rel (0) target = $region29
    $region28: #{projection_log_softmax.1} parent=1 // pred_region
      %146 = dma.done [#allocation4], 256
    $region29: #{projection_log_softmax.1} parent=1 // pred_fallthru
      _
    %147 = vsyncpa [#allocation4], 1

</llo_original>
